<compile_context>
chip_gen: v7x
topology: tpu7x:2x2x1
jax: 0.10.0
libtpu: 0.0.40
codegen_flags: <defaults>
</compile_context>

<pallas_src>
from dataclasses import dataclass

import numpy as np
import jax
import jax.numpy as jnp
from jax import lax
from jax.experimental import pallas as pl
from jax.experimental.pallas import tpu as pltpu

LN_EPS = 1e-5
_LANE = 128
_SUBLANE = 8
_PI = float(np.pi)
_TWO_PI = float(2.0 * np.pi)
_DROP_BITS_MAX = 2**31 - 1  # host-side dropout bits are int32 uniform in [0, 2^31-1)


def _round_up(x, m):
    return ((x + m - 1) // m) * m


@dataclass(frozen=True)
class LayerCfg:
    layer_norm: bool = False     # LayerNorm(elementwise_affine=False), eps=1e-5
    relu: bool = False
    dropout: bool = False
    wrap_output: bool = False    # modulo_with_wrapped_range to [-pi, pi)


def _make_fused_mlp_kernel(layer_cfgs, true_out_dims, dropout_prob,
                           dropout_active, compute_dtype):
    """Builds the fused  x -> [Linear (+LN)(+ReLU)(+Dropout)(+wrap)]*  kernel body."""
    inv_keep = 1.0 / (1.0 - dropout_prob) if dropout_prob < 1.0 else 0.0
    keep_thr = int(dropout_prob * _DROP_BITS_MAX)   # compile-time integer threshold

    def kernel(*refs):
        # refs = x_tile, then per layer (w, b[, dropout_bits_tile]), then out_tile.
        idx = 0
        x_ref = refs[idx]; idx += 1
        layer_refs = []
        for active in dropout_active:
            w_ref, b_ref = refs[idx], refs[idx + 1]; idx += 2
            bits_ref = None
            if active:
                bits_ref = refs[idx]; idx += 1
            layer_refs.append((w_ref, b_ref, bits_ref))
        o_ref = refs[idx]

        h = x_ref[...]
        for cfg, d_true, (w_ref, b_ref, bits_ref) in zip(
                layer_cfgs, true_out_dims, layer_refs):
            # MXU matmul on lane-dense (multiple-of-128) tiles.  compute_dtype can be
            # bfloat16 for real model widths (halves DMA bytes, ~4x MXU rate); the
            # float32 default keeps bit-tight eval accuracy for the small demo.
            y = jnp.dot(h.astype(compute_dtype), w_ref[...].astype(compute_dtype),
                        preferred_element_type=jnp.float32)
            y = y + b_ref[...]
            if cfg.layer_norm:
                # Padded lane columns of y are exactly zero (padded W columns and b
                # entries are zero-filled), so full-width sums divided by the *true*
                # feature count give the correct LayerNorm moments.
                inv_n = 1.0 / float(d_true)
                mean = jnp.sum(y, axis=-1, keepdims=True) * inv_n
                mean_sq = jnp.sum(y * y, axis=-1, keepdims=True) * inv_n
                var = mean_sq - mean * mean
                y = (y - mean) * lax.rsqrt(var + LN_EPS)
            if cfg.relu:
                y = jnp.maximum(y, 0.0)
            if bits_ref is not None:                       # training-mode dropout
                keep = bits_ref[...] >= keep_thr           # one integer compare
                y = jnp.where(keep, y * inv_keep, 0.0)     # one select + one mul
            if cfg.wrap_output:
                # modulo_with_wrapped_range(v) = ((v + pi) mod 2*pi) - pi, via floor.
                t = y + _PI
                y = t - jnp.floor(t * (1.0 / _TWO_PI)) * _TWO_PI - _PI
            h = y
        o_ref[...] = h.astype(o_ref.dtype)

    return kernel


def fused_mlp_forward(x, weights, biases, layer_cfgs, *, dropout_prob=0.1,
                      training=False, rng=None, tile_batch=128,
                      compute_dtype=jnp.float32):
    """Runs a whole Linear(+LN)(+ReLU)(+Dropout) stack in ONE pallas_call.

    x: (..., d_in) f32; weights[i]: (d_in_i, d_out_i) (already transposed vs torch
    Linear).  Leading dims are flattened into rows; rows use a 128-aligned batch
    tile; every feature dim is zero-padded to a multiple of 128 so the MXU sees
    dense tiles and output stores are lane-dense (unmasked vst).
    """
    orig_shape = x.shape
    d_in = int(orig_shape[-1])
    assert d_in == int(weights[0].shape[0])
    x2 = x.reshape(-1, d_in)
    n_rows = int(x2.shape[0])

    dims = [d_in] + [int(w.shape[1]) for w in weights]
    dims_pad = [_round_up(d, _LANE) for d in dims]

    # Batch tile: >=128 rows when there is enough work, 8-aligned otherwise.
    eff_tile = min(int(tile_batch), _round_up(n_rows, _SUBLANE))
    n_rows_pad = _round_up(n_rows, eff_tile)

    x_pad = jnp.zeros((n_rows_pad, dims_pad[0]), x2.dtype).at[:n_rows, :d_in].set(x2)

    dropout_active = tuple(training and cfg.dropout and dropout_prob > 0.0
                           for cfg in layer_cfgs)
    if any(dropout_active):
        if rng is None:
            raise ValueError("training-mode dropout needs an rng key")
        layer_keys = jax.random.split(rng, len(layer_cfgs))

    inputs = [x_pad]
    in_specs = [pl.BlockSpec((eff_tile, dims_pad[0]), lambda i: (i, 0))]
    weight_bytes = 0
    stream_bytes = eff_tile * (dims_pad[0] + dims_pad[-1]) * 4
    for li, (w, b) in enumerate(zip(weights, biases)):
        di, do = int(w.shape[0]), int(w.shape[1])
        di_p, do_p = dims_pad[li], dims_pad[li + 1]
        w_pad = jnp.zeros((di_p, do_p), jnp.float32).at[:di, :do].set(w)
        b_pad = jnp.zeros((1, do_p), jnp.float32).at[0, :do].set(b)
        inputs += [w_pad, b_pad]
        # Grid-invariant weight/bias blocks (constant index_map) stay VMEM-resident
        # across the batch grid.  (pl.Buffered(1) could pin a single buffer if the
        # weight ever shows up double-buffered in the VMEM budget.)
        in_specs += [pl.BlockSpec((di_p, do_p), lambda i: (0, 0)),
                     pl.BlockSpec((1, do_p), lambda i: (0, 0))]
        weight_bytes += (di_p * do_p + do_p) * 4
        if dropout_active[li]:
            bits = jax.random.randint(layer_keys[li], (n_rows_pad, do_p),
                                      minval=0, maxval=_DROP_BITS_MAX,
                                      dtype=jnp.int32)
            inputs.append(bits)
            in_specs.append(pl.BlockSpec((eff_tile, do_p), lambda i: (i, 0)))
            stream_bytes += eff_tile * do_p * 4

    out_dim, out_dim_pad = dims[-1], dims_pad[-1]
    out_specs = pl.BlockSpec((eff_tile, out_dim_pad), lambda i: (i, 0))

    kernel = _make_fused_mlp_kernel(tuple(layer_cfgs), tuple(dims[1:]),
                                    float(dropout_prob), dropout_active,
                                    compute_dtype)

    # VMEM budget: resident weights + double-buffered streamed tiles (+ slack),
    # clamped so it never exceeds v7x's 64 MiB physical VMEM.
    vmem_limit = int(min(64 * 2**20,
                         max(32 * 2**20, 2 * (weight_bytes + 2 * stream_bytes))))

    out = pl.pallas_call(
        kernel,
        out_shape=jax.ShapeDtypeStruct((n_rows_pad, out_dim_pad), x2.dtype),
        grid_spec=pltpu.PrefetchScalarGridSpec(
            num_scalar_prefetch=0,
            grid=(n_rows_pad // eff_tile,),
            in_specs=in_specs,
            out_specs=out_specs,
        ),
        compiler_params=pltpu.CompilerParams(
            # Batch tiles are fully independent -> shard across v7x's two TCs.
            dimension_semantics=("parallel",),
            vmem_limit_bytes=vmem_limit,
        ),
    )(*inputs)

    out = out[:n_rows, :out_dim]
    return out.reshape(*orig_shape[:-1], out_dim)


# ----------------------------- module wrappers ------------------------------

def _linear_init(key, d_in, d_out):
    """torch.nn.Linear default init; weight stored transposed as (d_in, d_out)."""
    kw, kb = jax.random.split(key)
    bound = 1.0 / float(np.sqrt(d_in))
    w = jax.random.uniform(kw, (d_in, d_out), jnp.float32, -bound, bound)
    b = jax.random.uniform(kb, (d_out,), jnp.float32, -bound, bound)
    return w, b


class PallasSimpleMLP:
    """Linear -> ReLU -> Linear -> Dropout, fused into one kernel."""

    def __init__(self, key, input_size, hidden_size, output_size, dropout_prob=0.1):
        k1, k2 = jax.random.split(key)
        self.params = [_linear_init(k1, input_size, hidden_size),
                       _linear_init(k2, hidden_size, output_size)]
        self.cfgs = [LayerCfg(relu=True), LayerCfg(dropout=True)]
        self.dropout_prob = dropout_prob

    def __call__(self, x, *, training=False, rng=None):
        ws, bs = zip(*self.params)
        return fused_mlp_forward(x, ws, bs, self.cfgs, dropout_prob=self.dropout_prob,
                                 training=training, rng=rng)


class PallasResidualBlock:
    """dropout(relu(layernorm(linear(x)))) — the PyTorch forward never adds identity."""

    def __init__(self, key, input_dim, output_dim, dropout_prob=0.1):
        self.params = [_linear_init(key, input_dim, output_dim)]
        self.cfgs = [LayerCfg(layer_norm=True, relu=True, dropout=True)]
        self.dropout_prob = dropout_prob

    def __call__(self, x, *, training=False, rng=None):
        ws, bs = zip(*self.params)
        return fused_mlp_forward(x, ws, bs, self.cfgs, dropout_prob=self.dropout_prob,
                                 training=training, rng=rng)


class PallasCustomDecoder:
    """Initial layer + num_blocks ResidualBlocks + final Linear in ONE pallas_call."""

    def __init__(self, key, input_dim, hidden_dim, output_dim, num_blocks=1,
                 dropout_prob=0.1):
        keys = jax.random.split(key, num_blocks + 2)
        self.params = [_linear_init(keys[0], input_dim, hidden_dim)]
        self.cfgs = [LayerCfg(layer_norm=True, relu=True, dropout=True)]
        for i in range(num_blocks):
            self.params.append(_linear_init(keys[1 + i], hidden_dim, hidden_dim))
            self.cfgs.append(LayerCfg(layer_norm=True, relu=True, dropout=True))
        self.params.append(_linear_init(keys[-1], hidden_dim, output_dim))
        self.cfgs.append(LayerCfg())
        self.dropout_prob = dropout_prob

    def __call__(self, x, *, training=False, rng=None, wrap_output=False):
        cfgs = list(self.cfgs)
        if wrap_output:   # fuse modulo_with_wrapped_range into the final-layer epilogue
            cfgs[-1] = LayerCfg(wrap_output=True)
        ws, bs = zip(*self.params)
        return fused_mlp_forward(x, ws, bs, cfgs, dropout_prob=self.dropout_prob,
                                 training=training, rng=rng)


class PallasCustomVAEDecoder:

    def __init__(self, key, input_dim, vae_latent_dim, decoder_hidden_dim,
                 output_dim, num_blocks=1):
        k1, k2, k3 = jax.random.split(key, 3)
        self.mean_encoder = PallasResidualBlock(k1, input_dim, vae_latent_dim)
        self.var_encoder = PallasResidualBlock(k2, input_dim, vae_latent_dim)
        self.var_eps = 1e-4
        self.decoder = PallasCustomDecoder(k3, vae_latent_dim, decoder_hidden_dim,
                                           output_dim, num_blocks)

    def __call__(self, x, *, sample_rng, temperature=1.0, training=False,
                 rng=None, wrap_output=False):
        r1 = r2 = r3 = None
        if training and rng is not None:
            r1, r2, r3 = jax.random.split(rng, 3)
        mu = self.mean_encoder(x, training=training, rng=r1)
        raw = self.var_encoder(x, training=training, rng=r2)
        # TODO(synk): torch.distributions.Normal has no Pallas equivalent; the
        # reparameterized sample and analytic KL-vs-N(0,1) are trivial elementwise
        # JAX ops between the fused Pallas MLP kernels.
        var = jnp.exp(raw) + self.var_eps
        scale = temperature * jnp.sqrt(var)
        eps = jax.random.normal(sample_rng, mu.shape, mu.dtype)
        latents = mu + scale * eps                       # Normal(mu, scale).rsample()
        kl = -jnp.log(scale) + 0.5 * (scale * scale + mu * mu) - 0.5
        outputs = self.decoder(latents, training=training, rng=r3,
                               wrap_output=wrap_output)
        return outputs, latents, (mu, scale), kl


@dataclass(frozen=True)
class ModelCfg:
    input_size: int = 6
    proj_hid_size: int = 32
    llm_embd_size: int = 16
    num_res_per_group: int = 1
    vae_latent_dim: int = 8
    decoder_hidden_dim: int = 32
    num_blocks: int = 1
    global_pe: bool = True
    n_timepoints: int = 2


class PallasProteinAngleFlowModel:

    def __init__(self, key, cfg: ModelCfg):
        self.cfg = cfg
        k1, k2, k3 = jax.random.split(key, 3)
        self.proj_in = PallasSimpleMLP(
            k1, cfg.input_size, cfg.proj_hid_size,
            cfg.llm_embd_size // cfg.num_res_per_group)
        # TODO(synk): the GPT2/pythia LLM backbone (self.llm_model) is out of scope
        # for this kernel; it is applied as an identity pass-through in __call__.
        self.vae_decoder = PallasCustomVAEDecoder(
            k2, input_dim=cfg.llm_embd_size, vae_latent_dim=cfg.vae_latent_dim,
            decoder_hidden_dim=cfg.decoder_hidden_dim,
            output_dim=cfg.input_size * cfg.num_res_per_group,
            num_blocks=cfg.num_blocks)
        self.global_pe_encoder = None
        if cfg.global_pe:
            self.global_pe_encoder = PallasSimpleMLP(
                k3, 1, cfg.proj_hid_size, cfg.llm_embd_size)

    def _global_pe(self, batch_size, n_residues, dtype):
        base = jnp.arange(1, self.cfg.n_timepoints + 1, dtype=dtype)
        base = jnp.repeat(base, n_residues // self.cfg.num_res_per_group)
        return jnp.tile(base[None, :, None], (batch_size, 1, 1))

    def __call__(self, protein_angles, protein_length, *, sample_rng,
                 temperature=1.0, training=False, rng=None):
        r1 = r2 = r3 = None
        if training and rng is not None:
            r1, r2, r3 = jax.random.split(rng, 3)
        group_embeds = self.proj_in(protein_angles, training=training, rng=r1)
        b = group_embeds.shape[0]
        if self.cfg.global_pe:
            time_in = self._global_pe(b, protein_length, group_embeds.dtype)
            time_encoding = self.global_pe_encoder(time_in, training=training, rng=r2)
            group_embeds = group_embeds + time_encoding
        # TODO(synk): llm_outputs = self.llm_model(inputs_embeds=group_embeds) not
        # translated (transformer backbone); identity pass-through instead.
        llm_outputs_embeds = group_embeds
        vae_outputs, vae_latents, _, kl = self.vae_decoder(
            llm_outputs_embeds, sample_rng=sample_rng, temperature=temperature,
            training=training, rng=r3, wrap_output=True)
        kl = kl.sum(axis=-1)[:, :-1]
        return {"output_embeds": vae_outputs, "kl_divergence": kl,
                "latents": vae_latents}


# --------------------------- pure-JAX reference -----------------------------

def _ref_mlp(x, weights, biases, cfgs):
    h = x
    for w, b, cfg in zip(weights, biases, cfgs):
        y = jnp.dot(h, w, precision=lax.Precision.HIGHEST) + b
        if cfg.layer_norm:
            mean = jnp.mean(y, axis=-1, keepdims=True)
            var = jnp.mean((y - mean) ** 2, axis=-1, keepdims=True)
            y = (y - mean) * lax.rsqrt(var + LN_EPS)
        if cfg.relu:
            y = jnp.maximum(y, 0.0)
        if cfg.wrap_output:
            t = y + _PI
            y = t - jnp.floor(t * (1.0 / _TWO_PI)) * _TWO_PI - _PI
        h = y
    return h   # eval mode: dropout is identity


def _ref_module(mod, x, wrap_output=False):
    cfgs = list(mod.cfgs)
    if wrap_output:
        cfgs[-1] = LayerCfg(wrap_output=True)
    ws, bs = zip(*mod.params)
    return _ref_mlp(x, ws, bs, cfgs)


def _reference_forward(model, protein_angles, protein_length, sample_rng,
                       temperature=1.0):
    cfg = model.cfg
    ge = _ref_module(model.proj_in, protein_angles)
    if cfg.global_pe:
        ti = model._global_pe(protein_angles.shape[0], protein_length, ge.dtype)
        ge = ge + _ref_module(model.global_pe_encoder, ti)
    h = ge                                            # identity LLM
    vd = model.vae_decoder
    mu = _ref_module(vd.mean_encoder, h)
    raw = _ref_module(vd.var_encoder, h)
    var = jnp.exp(raw) + vd.var_eps
    scale = temperature * jnp.sqrt(var)
    eps = jax.random.normal(sample_rng, mu.shape, mu.dtype)
    latents = mu + scale * eps
    out = _ref_module(vd.decoder, latents, wrap_output=True)
    kl = (-jnp.log(scale) + 0.5 * (scale * scale + mu * mu) - 0.5).sum(-1)[:, :-1]
    return out, kl


def _circular_diff(a, b):
    d = a - b + _PI
    d = d - jnp.floor(d * (1.0 / _TWO_PI)) * _TWO_PI - _PI
    return jnp.abs(d)


if __name__ == "__main__":
    root = jax.random.PRNGKey(0)
    k_model, k_x, k_sample, k_drop = jax.random.split(root, 4)

    cfg = ModelCfg()
    model = PallasProteinAngleFlowModel(k_model, cfg)

    batch = 2
    protein_length = 4                                           # residues, groups of 1
    seq = cfg.n_timepoints * (protein_length // cfg.num_res_per_group)   # = 8
    protein_angles = jax.random.uniform(
        k_x, (batch, seq, cfg.input_size), jnp.float32, -_PI, _PI)

    # Eval-mode forward through the fused Pallas kernels.
    out = model(protein_angles, protein_length, sample_rng=k_sample)
    out = jax.block_until_ready(out)
    assert out["output_embeds"].shape == (batch, seq,
                                          cfg.input_size * cfg.num_res_per_group)
    assert out["kl_divergence"].shape == (batch, seq - 1)

    # Verify against a pure-JAX reference of the same forward pass (same params,
    # same reparameterization noise).  Outputs are angles -> compare circularly.
    ref_out, ref_kl = _reference_forward(model, protein_angles, protein_length, k_sample)
    assert float(jnp.max(_circular_diff(out["output_embeds"], ref_out))) < 2e-3, \
        "output mismatch vs reference"
    assert jnp.allclose(out["kl_divergence"], ref_kl, atol=1e-2, rtol=1e-2), \
        "kl mismatch vs reference"

    # Training-mode forward (dropout active via integer-threshold masks).
    out_tr = model(protein_angles, protein_length, sample_rng=k_sample,
                   training=True, rng=k_drop)
    out_tr = jax.block_until_ready(out_tr)
    assert out_tr["output_embeds"].shape == out["output_embeds"].shape
    assert bool(jnp.all(jnp.isfinite(out_tr["output_embeds"])))
    assert bool(jnp.all(jnp.isfinite(out_tr["kl_divergence"])))

    print("KERNEL_OK")
</pallas_src>

<mosaic_0001>
module attributes {stable_mosaic.version = 11 : i64} {
  func.func @kernel(%arg0: i32, %arg1: memref<16x128xf32, #tpu.memory_space<vmem>>, %arg2: memref<128x128xf32, #tpu.memory_space<vmem>>, %arg3: memref<1x128xf32, #tpu.memory_space<vmem>>, %arg4: memref<128x128xf32, #tpu.memory_space<vmem>>, %arg5: memref<1x128xf32, #tpu.memory_space<vmem>>, %arg6: memref<16x128xf32, #tpu.memory_space<vmem>>) attributes {dimension_semantics = [#tpu.dimension_semantics<parallel>], iteration_bounds = array<i64: 1>, scalar_prefetch = 0 : i64, scratch_operands = 0 : i64, tpu.core_type = #tpu.core_type<tc>, window_params = [{transform_indices = @transform_0, window_bounds = array<i64: 16, 128>}, {pipeline_mode = #tpu.pipeline_mode<synchronous>, transform_indices = @transform_1, window_bounds = array<i64: 128, 128>}, {pipeline_mode = #tpu.pipeline_mode<synchronous>, transform_indices = @transform_2, window_bounds = array<i64: 1, 128>}, {pipeline_mode = #tpu.pipeline_mode<synchronous>, transform_indices = @transform_3, window_bounds = array<i64: 128, 128>}, {pipeline_mode = #tpu.pipeline_mode<synchronous>, transform_indices = @transform_4, window_bounds = array<i64: 1, 128>}, {transform_indices = @transform_5, window_bounds = array<i64: 16, 128>}]} {
    %c0 = arith.constant 0 : index
    %c0_0 = arith.constant 0 : index
    %0 = vector.load %arg1[%c0, %c0_0] : memref<16x128xf32, #tpu.memory_space<vmem>>, vector<16x128xf32>
    %c0_1 = arith.constant 0 : index
    %c0_2 = arith.constant 0 : index
    %1 = vector.load %arg2[%c0_1, %c0_2] : memref<128x128xf32, #tpu.memory_space<vmem>>, vector<128x128xf32>
    %cst = arith.constant dense<0.000000e+00> : vector<16x128xf32>
    %2 = tpu.matmul %0, %1, %cst {dimension_numbers = #tpu.dot_dimension_numbers<[1], [0], [0], [1], [0, 0, 1, 1], [], []>} : vector<16x128xf32>, vector<128x128xf32>, vector<16x128xf32> -> vector<16x128xf32>
    %c0_3 = arith.constant 0 : index
    %c0_4 = arith.constant 0 : index
    %3 = vector.load %arg3[%c0_3, %c0_4] : memref<1x128xf32, #tpu.memory_space<vmem>>, vector<1x128xf32>
    %4 = vector.broadcast %3 : vector<1x128xf32> to vector<16x128xf32>
    %5 = arith.addf %2, %4 : vector<16x128xf32>
    %cst_5 = arith.constant 0.000000e+00 : f32
    %6 = vector.broadcast %cst_5 : f32 to vector<16x128xf32>
    %7 = arith.maximumf %5, %6 : vector<16x128xf32>
    %c0_6 = arith.constant 0 : index
    %c0_7 = arith.constant 0 : index
    %8 = vector.load %arg4[%c0_6, %c0_7] : memref<128x128xf32, #tpu.memory_space<vmem>>, vector<128x128xf32>
    %cst_8 = arith.constant dense<0.000000e+00> : vector<16x128xf32>
    %9 = tpu.matmul %7, %8, %cst_8 {dimension_numbers = #tpu.dot_dimension_numbers<[1], [0], [0], [1], [0, 0, 1, 1], [], []>} : vector<16x128xf32>, vector<128x128xf32>, vector<16x128xf32> -> vector<16x128xf32>
    %c0_9 = arith.constant 0 : index
    %c0_10 = arith.constant 0 : index
    %10 = vector.load %arg5[%c0_9, %c0_10] : memref<1x128xf32, #tpu.memory_space<vmem>>, vector<1x128xf32>
    %11 = vector.broadcast %10 : vector<1x128xf32> to vector<16x128xf32>
    %12 = arith.addf %9, %11 : vector<16x128xf32>
    %c0_11 = arith.constant 0 : index
    %c0_12 = arith.constant 0 : index
    %13 = vector.load %arg6[%c0_11, %c0_12] : memref<16x128xf32, #tpu.memory_space<vmem>>, vector<16x128xf32>
    tpu.vector_store %arg6[%c0_11, %c0_12], %12 {strides = array<i32>} : memref<16x128xf32, #tpu.memory_space<vmem>>, vector<16x128xf32>,
    return
  }
  func.func @transform_0(%arg0: i32) -> (i32, i32) {
    %c0_i32 = arith.constant 0 : i32
    %c0_i32_0 = arith.constant 0 : i32
    return %arg0, %c0_i32 : i32, i32
  }
  func.func @transform_1(%arg0: i32) -> (i32, i32) {
    %c0_i32 = arith.constant 0 : i32
    %c0_i32_0 = arith.constant 0 : i32
    %c0_i32_1 = arith.constant 0 : i32
    return %c0_i32, %c0_i32_0 : i32, i32
  }
  func.func @transform_2(%arg0: i32) -> (i32, i32) {
    %c0_i32 = arith.constant 0 : i32
    %c0_i32_0 = arith.constant 0 : i32
    %c0_i32_1 = arith.constant 0 : i32
    return %c0_i32, %c0_i32_0 : i32, i32
  }
  func.func @transform_3(%arg0: i32) -> (i32, i32) {
    %c0_i32 = arith.constant 0 : i32
    %c0_i32_0 = arith.constant 0 : i32
    %c0_i32_1 = arith.constant 0 : i32
    return %c0_i32, %c0_i32_0 : i32, i32
  }
  func.func @transform_4(%arg0: i32) -> (i32, i32) {
    %c0_i32 = arith.constant 0 : i32
    %c0_i32_0 = arith.constant 0 : i32
    %c0_i32_1 = arith.constant 0 : i32
    return %c0_i32, %c0_i32_0 : i32, i32
  }
  func.func @transform_5(%arg0: i32) -> (i32, i32) {
    %c0_i32 = arith.constant 0 : i32
    %c0_i32_0 = arith.constant 0 : i32
    return %arg0, %c0_i32 : i32, i32
  }
}

</mosaic_0001>

<llo_original>
// kernel: tpu_custom_call.1
$region0: #{tpu_custom_call.1}
  #allocation0 [shape = 'u32[]', space=smem, size = 0x4, offset = 0x4, fixed_abs, tag = 'smem constant byte address 0x4 - core index']
  #allocation1 [shape = 'u32[144,128]{1,0:T(1,128)}', space=vmem, size = 0x12000, scoped, tag = 'internal scratch']
  %s0 = inlined_call_operand.hbm [shape: f32[16,128], index: 0, kind: input, shape index: {}]
  %s1 = inlined_call_operand.hbm [shape: f32[128,128], index: 1, kind: input, shape index: {}]
  %s2 = inlined_call_operand.vmem [shape: f32[1,128], index: 2, kind: input, shape index: {}]
  %s3 = inlined_call_operand.hbm [shape: f32[128,128], index: 3, kind: input, shape index: {}]
  %s4 = inlined_call_operand.vmem [shape: f32[1,128], index: 4, kind: input, shape index: {}]
  %s5 = inlined_call_operand.hbm [shape: f32[16,128], index: 5, kind: output, shape index: {}]
  %s6 = sld [smem:[#allocation0]]
  $region42: #{tpu_custom_call.1} parent=0
    _
  %s8 = ssub.s32 1, %s6
  %s9 = scalar_select 0, %s8, %s6
  $region1: #{tpu_custom_call.1} parent=0
    #allocation2 [shape = 'u8[8192]{0}', space=vmem, size = 0x2000, scoped, tag = 'input window, operand 0, single buffered']
    #allocation3 [shape = 's32[1]{0}', space=sflag, size = 0x4, scoped, tag = 'scoped memory for tpu_custom_call.1']
    #allocation4 [shape = 's32[1]{0}', space=sflag, size = 0x4, scoped, tag = 'scoped memory for tpu_custom_call.1']
    #allocation5 [shape = 'u8[65536]{0}', space=vmem, size = 0x10000, scoped, tag = 'input window, operand 1, single buffered']
    #allocation6 [shape = 's32[1]{0}', space=sflag, size = 0x4, scoped, tag = 'scoped memory for tpu_custom_call.1']
    #allocation7 [shape = 'u8[65536]{0}', space=vmem, size = 0x10000, scoped, tag = 'input window, operand 3, single buffered']
    #allocation8 [shape = 'u8[8192]{0}', space=vmem, size = 0x2000, scoped, tag = 'output window, operand 0, single buffered']
    %10 = vsyncpa [#allocation3], 0
    %11 = vsyncpa [#allocation6], 0
    %12 = vsyncpa [#allocation4], 0
    // Predicated region
    $region2: #{tpu_custom_call.1} parent=1 // pred_check
      _
    $region3: #{tpu_custom_call.1} parent=1 // pred_check_branch
      %14 = sbr.rel (0) target = $region5
    $region4: #{tpu_custom_call.1} parent=1 // pred_region
      %s16 = ssub.s32 256, 256
      %17 = vsyncadd [#allocation3], %s16
      %s18 = sshll.u32 [#allocation2], 4
      %s19 = int_to_ptr.vmem [resolvable:$true] %s18
      %24 = dma.hbm_to_vmem [thread:$0]  %s0, 256, %s19, [#allocation3], 128, 128, 8
    $region5: #{tpu_custom_call.1} parent=1 // pred_fallthru
      _
    // Predicated region
    $region6: #{tpu_custom_call.1} parent=1 // pred_check
      _
    $region7: #{tpu_custom_call.1} parent=1 // pred_check_branch
      %26 = sbr.rel (0) target = $region9
    $region8: #{tpu_custom_call.1} parent=1 // pred_region
      %s28 = ssub.s32 2048, 2048
      %29 = vsyncadd [#allocation6], %s28
      %s30 = sshll.u32 [#allocation5], 4
      %s31 = int_to_ptr.vmem [resolvable:$true] %s30
      %36 = dma.hbm_to_vmem [thread:$0]  %s1, 2048, %s31, [#allocation6], 128, 128, 8
    $region9: #{tpu_custom_call.1} parent=1 // pred_fallthru
      _
    // Predicated region
    $region10: #{tpu_custom_call.1} parent=1 // pred_check
      _
    $region11: #{tpu_custom_call.1} parent=1 // pred_check_branch
      %38 = sbr.rel (0) target = $region13
    $region12: #{tpu_custom_call.1} parent=1 // pred_region
      _
    $region13: #{tpu_custom_call.1} parent=1 // pred_fallthru
      _
    // Predicated region
    $region14: #{tpu_custom_call.1} parent=1 // pred_check
      _
    $region15: #{tpu_custom_call.1} parent=1 // pred_check_branch
      %40 = sbr.rel (0) target = $region17
    $region16: #{tpu_custom_call.1} parent=1 // pred_region
      %s42 = ssub.s32 2048, 2048
      %43 = vsyncadd [#allocation6], %s42
      %s44 = sshll.u32 [#allocation7], 4
      %s45 = int_to_ptr.vmem [resolvable:$true] %s44
      %50 = dma.hbm_to_vmem [thread:$0]  %s3, 2048, %s45, [#allocation6], 128, 128, 8
    $region17: #{tpu_custom_call.1} parent=1 // pred_fallthru
      _
    // Predicated region
    $region18: #{tpu_custom_call.1} parent=1 // pred_check
      _
    $region19: #{tpu_custom_call.1} parent=1 // pred_check_branch
      %52 = sbr.rel (0) target = $region21
    $region20: #{tpu_custom_call.1} parent=1 // pred_region
      _
    $region21: #{tpu_custom_call.1} parent=1 // pred_fallthru
      _
    // Predicated region
    $region22: #{tpu_custom_call.1} parent=1 // pred_check
      _
    $region23: #{tpu_custom_call.1} parent=1 // pred_check_branch
      %54 = sbr.rel (0) target = $region25
    $region24: #{tpu_custom_call.1} parent=1 // pred_region
      %55 = dma.done [#allocation3], 256
    $region25: #{tpu_custom_call.1} parent=1 // pred_fallthru
      _
    // Predicated region
    $region26: #{tpu_custom_call.1} parent=1 // pred_check
      _
    $region27: #{tpu_custom_call.1} parent=1 // pred_check_branch
      %57 = sbr.rel (0) target = $region29
    $region28: #{tpu_custom_call.1} parent=1 // pred_region
      %58 = dma.done [#allocation6], 2048
    $region29: #{tpu_custom_call.1} parent=1 // pred_fallthru
      _
    // Predicated region
    $region30: #{tpu_custom_call.1} parent=1 // pred_check
      _
    $region31: #{tpu_custom_call.1} parent=1 // pred_check_branch
      %60 = sbr.rel (0) target = $region33
    $region32: #{tpu_custom_call.1} parent=1 // pred_region
      %61 = dma.done [#allocation6], 2048
    $region33: #{tpu_custom_call.1} parent=1 // pred_fallthru
      _
    %v62 = vld [vmem:[#allocation2] sm:$0xff]
    %v63 = vld [vmem:[#allocation2 + $0x8] sm:$0xff]
    %v64 = vld [vmem:[#allocation5] sm:$0xff]
    %v65 = vld [vmem:[#allocation5 + $0x8] sm:$0xff]
    %v66 = vld [vmem:[#allocation5 + $0x10] sm:$0xff]
    %v67 = vld [vmem:[#allocation5 + $0x18] sm:$0xff]
    %v68 = vld [vmem:[#allocation5 + $0x20] sm:$0xff]
    %v69 = vld [vmem:[#allocation5 + $0x28] sm:$0xff]
    %v70 = vld [vmem:[#allocation5 + $0x30] sm:$0xff]
    %v71 = vld [vmem:[#allocation5 + $0x38] sm:$0xff]
    %v72 = vld [vmem:[#allocation5 + $0x40] sm:$0xff]
    %v73 = vld [vmem:[#allocation5 + $0x48] sm:$0xff]
    %v74 = vld [vmem:[#allocation5 + $0x50] sm:$0xff]
    %v75 = vld [vmem:[#allocation5 + $0x58] sm:$0xff]
    %v76 = vld [vmem:[#allocation5 + $0x60] sm:$0xff]
    %v77 = vld [vmem:[#allocation5 + $0x68] sm:$0xff]
    %v78 = vld [vmem:[#allocation5 + $0x70] sm:$0xff]
    %v79 = vld [vmem:[#allocation5 + $0x78] sm:$0xff]
    %v80 = vld [vmem:[%s2] sm:$0x1]
    %v82 = vlaneseq
    %v83 = vshrl.u32 %v82, 7
    %v84 = vsub.s32 0, %v83
    %v85 = vrot.slane %v80, %v84
    %87 = vmatprep.subr.mxu0 0.0
    %88 = vmatpush1.msra.mxu0 %v64
    %89 = vmatprep.subr.mxu0 0.0
    %90 = vmatpush1.msra.mxu0 %v65
    %91 = vmatprep.subr.mxu0 0.0
    %92 = vmatpush1.msra.mxu0 %v66
    %93 = vmatprep.subr.mxu0 0.0
    %94 = vmatpush1.msra.mxu0 %v67
    %95 = vmatprep.subr.mxu0 0.0
    %96 = vmatpush1.msra.mxu0 %v68
    %97 = vmatprep.subr.mxu0 0.0
    %98 = vmatpush1.msra.mxu0 %v69
    %99 = vmatprep.subr.mxu0 0.0
    %100 = vmatpush1.msra.mxu0 %v70
    %101 = vmatprep.subr.mxu0 0.0
    %102 = vmatpush1.msra.mxu0 %v71
    %103 = vmatprep.subr.mxu0 0.0
    %104 = vmatpush1.msra.mxu0 %v72
    %105 = vmatprep.subr.mxu0 0.0
    %106 = vmatpush1.msra.mxu0 %v73
    %107 = vmatprep.subr.mxu0 0.0
    %108 = vmatpush1.msra.mxu0 %v74
    %109 = vmatprep.subr.mxu0 0.0
    %110 = vmatpush1.msra.mxu0 %v75
    %111 = vmatprep.subr.mxu0 0.0
    %112 = vmatpush1.msra.mxu0 %v76
    %113 = vmatprep.subr.mxu0 0.0
    %114 = vmatpush1.msra.mxu0 %v77
    %115 = vmatprep.subr.mxu0 0.0
    %116 = vmatpush1.msra.mxu0 %v78
    %117 = vmatprep.subr.mxu0 0.0
    %118 = vmatpush1.msra.mxu0 %v79
    %119 = vmatprep.subr.mxu0 0.0
    %120 = vmatpush1.msra.mxu0 0.0
    %121 = vmatprep.subr.mxu0 0.0
    %122 = vmatpush1.msra.mxu0 0.0
    %123 = vmatprep.subr.mxu0 0.0
    %124 = vmatpush1.msra.mxu0 0.0
    %125 = vmatprep.subr.mxu0 0.0
    %126 = vmatpush1.msra.mxu0 0.0
    %127 = vmatprep.subr.mxu0 0.0
    %128 = vmatpush1.msra.mxu0 0.0
    %129 = vmatprep.subr.mxu0 0.0
    %130 = vmatpush1.msra.mxu0 0.0
    %131 = vmatprep.subr.mxu0 0.0
    %132 = vmatpush1.msra.mxu0 0.0
    %133 = vmatprep.subr.mxu0 0.0
    %134 = vmatpush1.msra.mxu0 0.0
    %135 = vmatprep.subr.mxu0 0.0
    %136 = vmatpush1.msra.mxu0 0.0
    %137 = vmatprep.subr.mxu0 0.0
    %138 = vmatpush1.msra.mxu0 0.0
    %139 = vmatprep.subr.mxu0 0.0
    %140 = vmatpush1.msra.mxu0 0.0
    %141 = vmatprep.subr.mxu0 0.0
    %142 = vmatpush1.msra.mxu0 0.0
    %143 = vmatprep.subr.mxu0 0.0
    %144 = vmatpush1.msra.mxu0 0.0
    %145 = vmatprep.subr.mxu0 0.0
    %146 = vmatpush1.msra.mxu0 0.0
    %147 = vmatprep.subr.mxu0 0.0
    %148 = vmatpush1.msra.mxu0 0.0
    %149 = vmatprep.subr.mxu0 0.0
    %150 = vmatpush1.msra.mxu0 0.0
    %151 = vmatprep.mubr.f32.mxu0 0.0
    %152 = vmatmul.mubr.f32.gmra.mrb[0].mxu0 %v62
    %v153 = vpop.f32.mrb[0].mxu0
    %v154 = vadd.f32 %v85, %v153
    %v155 = vpop.f32.mrb[0].mxu0
    %156 = vmatprep.mubr.f32.mxu0 0.0
    %157 = vmatmul.mubr.f32.gmra.mrb[0].mxu0 %v63
    %v158 = vpop.f32.mrb[0].mxu0
    %v159 = vadd.f32 %v85, %v158
    %v160 = vpop.f32.mrb[0].mxu0
    %161 = vdwg.mxu0
    %v162 = vmax.f32 %v154, 0.0
    %v163 = vmax.f32 %v159, 0.0
    %v164 = vld [vmem:[#allocation7] sm:$0xff]
    %v165 = vld [vmem:[#allocation7 + $0x8] sm:$0xff]
    %v166 = vld [vmem:[#allocation7 + $0x10] sm:$0xff]
    %v167 = vld [vmem:[#allocation7 + $0x18] sm:$0xff]
    %v168 = vld [vmem:[#allocation7 + $0x20] sm:$0xff]
    %v169 = vld [vmem:[#allocation7 + $0x28] sm:$0xff]
    %v170 = vld [vmem:[#allocation7 + $0x30] sm:$0xff]
    %v171 = vld [vmem:[#allocation7 + $0x38] sm:$0xff]
    %v172 = vld [vmem:[#allocation7 + $0x40] sm:$0xff]
    %v173 = vld [vmem:[#allocation7 + $0x48] sm:$0xff]
    %v174 = vld [vmem:[#allocation7 + $0x50] sm:$0xff]
    %v175 = vld [vmem:[#allocation7 + $0x58] sm:$0xff]
    %v176 = vld [vmem:[#allocation7 + $0x60] sm:$0xff]
    %v177 = vld [vmem:[#allocation7 + $0x68] sm:$0xff]
    %v178 = vld [vmem:[#allocation7 + $0x70] sm:$0xff]
    %v179 = vld [vmem:[#allocation7 + $0x78] sm:$0xff]
    %v180 = vld [vmem:[%s4] sm:$0x1]
    %v182 = vlaneseq
    %v183 = vshrl.u32 %v182, 7
    %v184 = vsub.s32 0, %v183
    %v185 = vrot.slane %v180, %v184
    %187 = vmatprep.subr.mxu0 0.0
    %188 = vmatpush1.msra.mxu0 %v164
    %189 = vmatprep.subr.mxu0 0.0
    %190 = vmatpush1.msra.mxu0 %v165
    %191 = vmatprep.subr.mxu0 0.0
    %192 = vmatpush1.msra.mxu0 %v166
    %193 = vmatprep.subr.mxu0 0.0
    %194 = vmatpush1.msra.mxu0 %v167
    %195 = vmatprep.subr.mxu0 0.0
    %196 = vmatpush1.msra.mxu0 %v168
    %197 = vmatprep.subr.mxu0 0.0
    %198 = vmatpush1.msra.mxu0 %v169
    %199 = vmatprep.subr.mxu0 0.0
    %200 = vmatpush1.msra.mxu0 %v170
    %201 = vmatprep.subr.mxu0 0.0
    %202 = vmatpush1.msra.mxu0 %v171
    %203 = vmatprep.subr.mxu0 0.0
    %204 = vmatpush1.msra.mxu0 %v172
    %205 = vmatprep.subr.mxu0 0.0
    %206 = vmatpush1.msra.mxu0 %v173
    %207 = vmatprep.subr.mxu0 0.0
    %208 = vmatpush1.msra.mxu0 %v174
    %209 = vmatprep.subr.mxu0 0.0
    %210 = vmatpush1.msra.mxu0 %v175
    %211 = vmatprep.subr.mxu0 0.0
    %212 = vmatpush1.msra.mxu0 %v176
    %213 = vmatprep.subr.mxu0 0.0
    %214 = vmatpush1.msra.mxu0 %v177
    %215 = vmatprep.subr.mxu0 0.0
    %216 = vmatpush1.msra.mxu0 %v178
    %217 = vmatprep.subr.mxu0 0.0
    %218 = vmatpush1.msra.mxu0 %v179
    %219 = vmatprep.subr.mxu0 0.0
    %220 = vmatpush1.msra.mxu0 0.0
    %221 = vmatprep.subr.mxu0 0.0
    %222 = vmatpush1.msra.mxu0 0.0
    %223 = vmatprep.subr.mxu0 0.0
    %224 = vmatpush1.msra.mxu0 0.0
    %225 = vmatprep.subr.mxu0 0.0
    %226 = vmatpush1.msra.mxu0 0.0
    %227 = vmatprep.subr.mxu0 0.0
    %228 = vmatpush1.msra.mxu0 0.0
    %229 = vmatprep.subr.mxu0 0.0
    %230 = vmatpush1.msra.mxu0 0.0
    %231 = vmatprep.subr.mxu0 0.0
    %232 = vmatpush1.msra.mxu0 0.0
    %233 = vmatprep.subr.mxu0 0.0
    %234 = vmatpush1.msra.mxu0 0.0
    %235 = vmatprep.subr.mxu0 0.0
    %236 = vmatpush1.msra.mxu0 0.0
    %237 = vmatprep.subr.mxu0 0.0
    %238 = vmatpush1.msra.mxu0 0.0
    %239 = vmatprep.subr.mxu0 0.0
    %240 = vmatpush1.msra.mxu0 0.0
    %241 = vmatprep.subr.mxu0 0.0
    %242 = vmatpush1.msra.mxu0 0.0
    %243 = vmatprep.subr.mxu0 0.0
    %244 = vmatpush1.msra.mxu0 0.0
    %245 = vmatprep.subr.mxu0 0.0
    %246 = vmatpush1.msra.mxu0 0.0
    %247 = vmatprep.subr.mxu0 0.0
    %248 = vmatpush1.msra.mxu0 0.0
    %249 = vmatprep.subr.mxu0 0.0
    %250 = vmatpush1.msra.mxu0 0.0
    %251 = vmatprep.mubr.f32.mxu0 0.0
    %252 = vmatmul.mubr.f32.gmra.mrb[0].mxu0 %v162
    %v253 = vpop.f32.mrb[0].mxu0
    %v254 = vadd.f32 %v185, %v253
    %v255 = vpop.f32.mrb[0].mxu0
    %256 = vmatprep.mubr.f32.mxu0 0.0
    %257 = vmatmul.mubr.f32.gmra.mrb[0].mxu0 %v163
    %v258 = vpop.f32.mrb[0].mxu0
    %v259 = vadd.f32 %v185, %v258
    %v260 = vpop.f32.mrb[0].mxu0
    %261 = vdwg.mxu0
    %262 = vst [vmem:[#allocation8] sm:$0xff] %v254
    %263 = vst [vmem:[#allocation8 + $0x8] sm:$0xff] %v259
    // Predicated region
    $region34: #{tpu_custom_call.1} parent=1 // pred_check
      _
    $region35: #{tpu_custom_call.1} parent=1 // pred_check_branch
      %265 = sbr.rel (0) target = $region37
    $region36: #{tpu_custom_call.1} parent=1 // pred_region
      %s267 = ssub.s32 256, 256
      %268 = vsyncadd [#allocation4], %s267
      %s269 = sshll.u32 [#allocation8], 4
      %s270 = int_to_ptr.vmem [resolvable:$true] %s269
      %275 = dma.vmem_to_hbm [thread:$0]  %s270, 256, %s5, [#allocation4], 128, 128, 8
    $region37: #{tpu_custom_call.1} parent=1 // pred_fallthru
      _
    // Predicated region
    $region38: #{tpu_custom_call.1} parent=1 // pred_check
      _
    $region39: #{tpu_custom_call.1} parent=1 // pred_check_branch
      %277 = sbr.rel (0) target = $region41
    $region40: #{tpu_custom_call.1} parent=1 // pred_region
      %278 = dma.done [#allocation4], 256
    $region41: #{tpu_custom_call.1} parent=1 // pred_fallthru
      _
    %279 = vsyncpa [#allocation3], 1
    %280 = vsyncpa [#allocation6], 1
    %281 = vsyncpa [#allocation4], 1

</llo_original>
